<compile_context>
chip_gen: v5e
topology: v5e:2x2
jax: 0.10.0
libtpu: 0.0.40
codegen_flags: <defaults>
</compile_context>

<pallas_src>
import math
import jax
import jax.numpy as jnp
from jax.experimental import pallas as pl
from jax.experimental.pallas import tpu as pltpu


# ----------------------------------------------------------------------------
# Kernels
# ----------------------------------------------------------------------------
def _support_kernel(x_ref, wg_ref, out_ref):
    """support[row_block] = x[row_block] @ Wg  (computed exactly once)."""
    out_ref[...] = jnp.dot(
        x_ref[...], wg_ref[...], preferred_element_type=jnp.float32
    ).astype(out_ref.dtype)


def _gcn_skip_kernel(adj_ref, sup_ref, x_row_ref, wl_ref, out_ref, acc_ref):
    """out[row_block] = ReLU(adj[row_block] @ support + x[row_block] @ Wl).

    Grid: (row_blocks, k_blocks).  The k axis tiles the contraction over
    columns of adj / rows of support and accumulates into VMEM scratch.
    """
    k = pl.program_id(1)

    @pl.when(k == 0)
    def _():
        # Initialize the accumulator with the skip term (once per row block).
        acc_ref[...] = jnp.dot(
            x_row_ref[...], wl_ref[...], preferred_element_type=jnp.float32
        )

    acc_ref[...] += jnp.dot(
        adj_ref[...], sup_ref[...], preferred_element_type=jnp.float32
    )

    @pl.when(k == pl.num_programs(1) - 1)
    def _():
        # activation = ReLU (bias=False path of the module)
        out_ref[...] = jnp.maximum(acc_ref[...], 0.0).astype(out_ref.dtype)


# ----------------------------------------------------------------------------
# Wrapper
# ----------------------------------------------------------------------------
def _pick_tile(n, candidates):
    """Largest candidate that divides n, else the full extent n."""
    for c in candidates:
        if c <= n and n % c == 0:
            return c
    return n


def gcn_skip_forward(adj, x, weights_g, weights_l, *, tm=None, tk=None):
    """Pallas implementation of GCNskip.forward((adj, x)) with bias=False."""
    N, N2 = adj.shape
    assert N == N2, "GCN input error！"
    F = x.shape[1]
    F2, O = weights_g.shape
    assert F == F2 and weights_l.shape == (F, O)

    # Lane-dense output: pad the feature dim up to a multiple of 128.
    O_pad = ((O + 127) // 128) * 128
    if O_pad != O:
        pad = ((0, 0), (0, O_pad - O))
        wg_p = jnp.pad(weights_g, pad)
        wl_p = jnp.pad(weights_l, pad)
    else:
        wg_p, wl_p = weights_g, weights_l

    # Tile selection: big row blocks to amortize per-step overhead, k tiles in
    # 128-lane multiples.  (tm, tk) f32 double-buffered stays << VMEM on all
    # of v5e / v6e / v7x for these caps (tm<=512, tk<=512 -> <=2 MiB/buffer).
    if tm is None:
        tm = _pick_tile(N, (512, 256, 128, 64, 32, 16, 8))
    if tk is None:
        tk = _pick_tile(N, (512, 384, 256, 128))
    assert N % tm == 0 and N % tk == 0

    # ---- Phase 1: support = x @ Wg (hoisted out of the row/K loops) --------
    support = pl.pallas_call(
        _support_kernel,
        out_shape=jax.ShapeDtypeStruct((N, O_pad), jnp.float32),
        grid_spec=pltpu.PrefetchScalarGridSpec(
            num_scalar_prefetch=0,
            grid=(N // tm,),
            in_specs=[
                pl.BlockSpec((tm, F), lambda i: (i, 0)),      # x row block
                pl.BlockSpec((F, O_pad), lambda i: (0, 0)),   # Wg (padded)
            ],
            out_specs=pl.BlockSpec((tm, O_pad), lambda i: (i, 0)),
        ),
        compiler_params=pltpu.CompilerParams(
            dimension_semantics=("parallel",)),
    )(x, wg_p)

    # ---- Phase 2: out = ReLU(adj @ support + x @ Wl) ------------------------
    cost = pl.CostEstimate(
        flops=2 * N * N * O_pad + 2 * N * F * O_pad,
        transcendentals=0,
        bytes_accessed=4 * (N * N + N * F + N * O_pad + F * O_pad + N * O_pad),
    )
    out_pad = pl.pallas_call(
        _gcn_skip_kernel,
        out_shape=jax.ShapeDtypeStruct((N, O_pad), x.dtype),
        grid_spec=pltpu.PrefetchScalarGridSpec(
            num_scalar_prefetch=0,
            grid=(N // tm, N // tk),
            in_specs=[
                pl.BlockSpec((tm, tk), lambda i, k: (i, k)),       # adj tile
                pl.BlockSpec((tk, O_pad), lambda i, k: (k, 0)),    # support tile
                pl.BlockSpec((tm, F), lambda i, k: (i, 0)),        # x row block (skip)
                pl.BlockSpec((F, O_pad), lambda i, k: (0, 0)),     # Wl (padded)
            ],
            out_specs=pl.BlockSpec((tm, O_pad), lambda i, k: (i, 0)),
            scratch_shapes=[pltpu.VMEM((tm, O_pad), jnp.float32)],
        ),
        compiler_params=pltpu.CompilerParams(
            dimension_semantics=("parallel", "arbitrary")),
        cost_estimate=cost,
    )(adj, support, x, wl_p)

    out = out_pad[:, :O]
    # Module returns (adj, output) when bias is None and activation is set.
    return adj, out


def init_params(key, input_features, output_features, dtype=jnp.float32):
    """Deterministic init matching GCNskip.reset_parameters (uniform(-std, std))."""
    std = 1.0 / math.sqrt(output_features)
    kg, kl = jax.random.split(key)
    weights_g = jax.random.uniform(kg, (input_features, output_features),
                                   dtype=dtype, minval=-std, maxval=std)
    weights_l = jax.random.uniform(kl, (input_features, output_features),
                                   dtype=dtype, minval=-std, maxval=std)
    return weights_g, weights_l


if __name__ == "__main__":
    # Small shapes: N nodes = 64, input_features = 32, output_features = 16
    N, F, O = 64, 32, 16
    key = jax.random.PRNGKey(0)
    k_adj, k_x, k_w = jax.random.split(key, 3)

    adj = jax.random.uniform(k_adj, (N, N), dtype=jnp.float32)
    # symmetrize + row-normalize a bit so it looks like an adjacency matrix
    adj = (adj + adj.T) * 0.5
    adj = adj / jnp.sum(adj, axis=1, keepdims=True)

    x = jax.random.normal(k_x, (N, F), dtype=jnp.float32)
    weights_g, weights_l = init_params(k_w, F, O)

    adj_out, out = gcn_skip_forward(adj, x, weights_g, weights_l)
    out = jax.block_until_ready(out)

    # Reference check in plain JAX (same math the PyTorch module does).
    ref = jnp.maximum(adj @ (x @ weights_g) + x @ weights_l, 0.0)
    assert out.shape == (N, O)
    assert jnp.allclose(out, ref, atol=1e-4, rtol=1e-4), "mismatch vs reference"

    print("KERNEL_OK")
</pallas_src>

<mosaic_0001>
module attributes {stable_mosaic.version = 11 : i64} {
  func.func @_support_kernel(%arg0: i32, %arg1: memref<64x32xf32, #tpu.memory_space<vmem>>, %arg2: memref<32x128xf32, #tpu.memory_space<vmem>>, %arg3: memref<64x128xf32, #tpu.memory_space<vmem>>) attributes {dimension_semantics = [#tpu.dimension_semantics<parallel>], iteration_bounds = array<i64: 1>, scalar_prefetch = 0 : i64, scratch_operands = 0 : i64, tpu.core_type = #tpu.core_type<tc>, window_params = [{transform_indices = @transform_0, window_bounds = array<i64: 64, 32>}, {pipeline_mode = #tpu.pipeline_mode<synchronous>, transform_indices = @transform_1, window_bounds = array<i64: 32, 128>}, {transform_indices = @transform_2, window_bounds = array<i64: 64, 128>}]} {
    %c0 = arith.constant 0 : index
    %c0_0 = arith.constant 0 : index
    %0 = vector.load %arg1[%c0, %c0_0] : memref<64x32xf32, #tpu.memory_space<vmem>>, vector<64x32xf32>
    %c0_1 = arith.constant 0 : index
    %c0_2 = arith.constant 0 : index
    %1 = vector.load %arg2[%c0_1, %c0_2] : memref<32x128xf32, #tpu.memory_space<vmem>>, vector<32x128xf32>
    %cst = arith.constant dense<0.000000e+00> : vector<64x128xf32>
    %2 = tpu.matmul %0, %1, %cst {dimension_numbers = #tpu.dot_dimension_numbers<[1], [0], [0], [1], [0, 0, 1, 1], [], []>} : vector<64x32xf32>, vector<32x128xf32>, vector<64x128xf32> -> vector<64x128xf32>
    %c0_3 = arith.constant 0 : index
    %c0_4 = arith.constant 0 : index
    %3 = vector.load %arg3[%c0_3, %c0_4] : memref<64x128xf32, #tpu.memory_space<vmem>>, vector<64x128xf32>
    tpu.vector_store %arg3[%c0_3, %c0_4], %2 {strides = array<i32>} : memref<64x128xf32, #tpu.memory_space<vmem>>, vector<64x128xf32>,
    return
  }
  func.func @transform_0(%arg0: i32) -> (i32, i32) {
    %c0_i32 = arith.constant 0 : i32
    %c0_i32_0 = arith.constant 0 : i32
    return %arg0, %c0_i32 : i32, i32
  }
  func.func @transform_1(%arg0: i32) -> (i32, i32) {
    %c0_i32 = arith.constant 0 : i32
    %c0_i32_0 = arith.constant 0 : i32
    %c0_i32_1 = arith.constant 0 : i32
    return %c0_i32, %c0_i32_0 : i32, i32
  }
  func.func @transform_2(%arg0: i32) -> (i32, i32) {
    %c0_i32 = arith.constant 0 : i32
    %c0_i32_0 = arith.constant 0 : i32
    return %arg0, %c0_i32 : i32, i32
  }
}

</mosaic_0001>

<llo_original>
// kernel: tpu_custom_call.1
$region0: #{tpu_custom_call.1}
  #allocation0 [shape = 'u32[]', space=smem, size = 0x4, offset = 0x4, fixed_abs, tag = 'smem constant byte address 0x4 - core index']
  #allocation1 [shape = 'u32[72,128]{1,0:T(1,128)}', space=vmem, size = 0x9000, scoped, tag = 'internal scratch']
  %s0 = inlined_call_operand.vmem [shape: f32[64,32], index: 0, kind: input, shape index: {}]
  %s1 = inlined_call_operand.vmem [shape: f32[32,128], index: 1, kind: input, shape index: {}]
  %s2 = inlined_call_operand.hbm [shape: f32[64,128], index: 2, kind: output, shape index: {}]
  %s3 = sld [smem:[#allocation0]]
  $region18: #{tpu_custom_call.1} parent=0
    _
  %s5 = ssub.s32 1, %s3
  %s6 = scalar_select 0, %s5, %s3
  $region1: #{tpu_custom_call.1} parent=0
    #allocation2 [shape = 'u8[32768]{0}', space=vmem, size = 0x8000, scoped, tag = 'output window, operand 0, single buffered']
    #allocation3 [shape = 's32[1]{0}', space=sflag, size = 0x4, scoped, tag = 'scoped memory for tpu_custom_call.1']
    %7 = vsyncpa [#allocation3], 0
    // Predicated region
    $region2: #{tpu_custom_call.1} parent=1 // pred_check
      _
    $region3: #{tpu_custom_call.1} parent=1 // pred_check_branch
      %9 = sbr.rel (0) target = $region5
    $region4: #{tpu_custom_call.1} parent=1 // pred_region
      _
    $region5: #{tpu_custom_call.1} parent=1 // pred_fallthru
      _
    // Predicated region
    $region6: #{tpu_custom_call.1} parent=1 // pred_check
      _
    $region7: #{tpu_custom_call.1} parent=1 // pred_check_branch
      %11 = sbr.rel (0) target = $region9
    $region8: #{tpu_custom_call.1} parent=1 // pred_region
      _
    $region9: #{tpu_custom_call.1} parent=1 // pred_fallthru
      _
    %v12 = vld [vmem:[%s0] sm:$0xff]
    %v13 = vld [vmem:[%s0 + $0x8] sm:$0xff]
    %v14 = vld [vmem:[%s0 + $0x10] sm:$0xff]
    %v15 = vld [vmem:[%s0 + $0x18] sm:$0xff]
    %v16 = vld [vmem:[%s0 + $0x20] sm:$0xff]
    %v17 = vld [vmem:[%s0 + $0x28] sm:$0xff]
    %v18 = vld [vmem:[%s0 + $0x30] sm:$0xff]
    %v19 = vld [vmem:[%s0 + $0x38] sm:$0xff]
    %v20 = vld [vmem:[%s1] sm:$0xff]
    %v21 = vld [vmem:[%s1 + $0x8] sm:$0xff]
    %v22 = vld [vmem:[%s1 + $0x10] sm:$0xff]
    %v23 = vld [vmem:[%s1 + $0x18] sm:$0xff]
    %vm24 = vcmask 261120
    %v26 = vsel %vm24, %v12, 0
    %v29 = vsel %vm24, %v13, 0
    %v32 = vsel %vm24, %v14, 0
    %v35 = vsel %vm24, %v15, 0
    %v38 = vsel %vm24, %v16, 0
    %v41 = vsel %vm24, %v17, 0
    %v44 = vsel %vm24, %v18, 0
    %v47 = vsel %vm24, %v19, 0
    %49 = vmatpush.msra.mxu0 0.0
    %50 = vmatpush.msra.mxu0 0.0
    %51 = vmatpush.msra.mxu0 0.0
    %52 = vmatpush.msra.mxu0 0.0
    %53 = vmatpush.msra.mxu0 0.0
    %54 = vmatpush.msra.mxu0 0.0
    %55 = vmatpush.msra.mxu0 0.0
    %56 = vmatpush.msra.mxu0 0.0
    %57 = vmatpush.msra.mxu0 0.0
    %58 = vmatpush.msra.mxu0 0.0
    %59 = vmatpush.msra.mxu0 0.0
    %60 = vmatpush.msra.mxu0 0.0
    %61 = vmatpush.msra.mxu0 %v23
    %62 = vmatpush.msra.mxu0 %v22
    %63 = vmatpush.msra.mxu0 %v21
    %64 = vmatpush.msra.mxu0 %v20
    %65 = vmatmul.f32.gmra.mxu0 %v26
    %v66 = vpop.f32.mrf.mxu0
    %v67 = vadd.f32 0.0, %v66
    %68 = vmatmul.f32.gmra.mxu0 %v29
    %v69 = vpop.f32.mrf.mxu0
    %v70 = vadd.f32 0.0, %v69
    %71 = vmatmul.f32.gmra.mxu0 %v32
    %v72 = vpop.f32.mrf.mxu0
    %v73 = vadd.f32 0.0, %v72
    %74 = vmatmul.f32.gmra.mxu0 %v35
    %v75 = vpop.f32.mrf.mxu0
    %v76 = vadd.f32 0.0, %v75
    %77 = vmatmul.f32.gmra.mxu0 %v38
    %v78 = vpop.f32.mrf.mxu0
    %v79 = vadd.f32 0.0, %v78
    %80 = vmatmul.f32.gmra.mxu0 %v41
    %v81 = vpop.f32.mrf.mxu0
    %v82 = vadd.f32 0.0, %v81
    %83 = vmatmul.f32.gmra.mxu0 %v44
    %v84 = vpop.f32.mrf.mxu0
    %v85 = vadd.f32 0.0, %v84
    %86 = vmatmul.f32.gmra.mxu0 %v47
    %v87 = vpop.f32.mrf.mxu0
    %v88 = vadd.f32 0.0, %v87
    %89 = vdwg.mxu0
    %90 = vst [vmem:[#allocation2] sm:$0xff] %v67
    %91 = vst [vmem:[#allocation2 + $0x8] sm:$0xff] %v70
    %92 = vst [vmem:[#allocation2 + $0x10] sm:$0xff] %v73
    %93 = vst [vmem:[#allocation2 + $0x18] sm:$0xff] %v76
    %94 = vst [vmem:[#allocation2 + $0x20] sm:$0xff] %v79
    %95 = vst [vmem:[#allocation2 + $0x28] sm:$0xff] %v82
    %96 = vst [vmem:[#allocation2 + $0x30] sm:$0xff] %v85
    %97 = vst [vmem:[#allocation2 + $0x38] sm:$0xff] %v88
    // Predicated region
    $region10: #{tpu_custom_call.1} parent=1 // pred_check
      _
    $region11: #{tpu_custom_call.1} parent=1 // pred_check_branch
      %99 = sbr.rel (0) target = $region13
    $region12: #{tpu_custom_call.1} parent=1 // pred_region
      %101 = vsyncadd [#allocation3], 0
      %s102 = sshll.u32 [#allocation2], 4
      %s103 = int_to_ptr.vmem [resolvable:$true] %s102
      %s104 = sshll.u32 %s2, 4
      %s105 = int_to_ptr.hbm [resolvable:$true] %s104
      %110 = dma.vmem_to_hbm [thread:$0]  %s103, 1024, %s105, [#allocation3], 128, 128, 8
    $region13: #{tpu_custom_call.1} parent=1 // pred_fallthru
      _
    // Predicated region
    $region14: #{tpu_custom_call.1} parent=1 // pred_check
      _
    $region15: #{tpu_custom_call.1} parent=1 // pred_check_branch
      %112 = sbr.rel (0) target = $region17
    $region16: #{tpu_custom_call.1} parent=1 // pred_region
      %114 = dma.done [#allocation3], 1024
    $region17: #{tpu_custom_call.1} parent=1 // pred_fallthru
      _
    %115 = vsyncpa [#allocation3], 1

</llo_original>
